<compile_context>
chip_gen: v6e
topology: v6e:2x2x1
jax: 0.10.0
libtpu: 0.0.40
codegen_flags: <defaults>
</compile_context>

<pallas_src>
import functools

import jax
import jax.numpy as jnp
from jax import lax
from jax.experimental import pallas as pl
from jax.experimental.pallas import tpu as pltpu

OUT_W = 128      # lane-dense head width (>= 2 * action_dim)
BIAS_ROWS = 8    # sublane-aligned bias pack


def _actor_kernel(action_bound, action_dim,
                  s_ref, w1_ref, w2_ref, w3_ref, w45_ref, b_ref,
                  out_ref):
    x = s_ref[...]

    # fc1..fc3: Linear + ReLU.  Biases live one-per-row in the packed b_ref;
    # accumulation is always f32, next-layer input is cast back to the
    # (possibly bf16) weight dtype for the MXU.
    h = jnp.dot(x, w1_ref[...], preferred_element_type=jnp.float32)
    h = jnp.maximum(h + b_ref[0:1, 0:w1_ref.shape[1]], 0.0)

    h = jnp.dot(h.astype(w2_ref.dtype), w2_ref[...],
                preferred_element_type=jnp.float32)
    h = jnp.maximum(h + b_ref[1:2, 0:w2_ref.shape[1]], 0.0)

    h = jnp.dot(h.astype(w3_ref.dtype), w3_ref[...],
                preferred_element_type=jnp.float32)
    h = jnp.maximum(h + b_ref[2:3, 0:w3_ref.shape[1]], 0.0)

    # Fused, lane-dense head: one (16, 128) matmul producing
    # [mu_logits | std_logits | zero-pad], stored as one full-lane block.
    z = jnp.dot(h.astype(w45_ref.dtype), w45_ref[...],
                preferred_element_type=jnp.float32)
    z = z + b_ref[3:4, :]

    col = lax.broadcasted_iota(jnp.int32, z.shape, 1)
    mu = jnp.tanh(z) * action_bound                      # fc4 branch (Tanh * bound)
    sp = jnp.where(z > 20.0, z, jnp.log1p(jnp.exp(z)))   # fc5 branch (Softplus)
    out_ref[...] = jnp.where(col < action_dim, mu, sp)


def pack_params(params, *, compute_dtype=jnp.float32):
    """One-time packing of raw (W, b) params for the kernel.

    Fuses fc4/fc5 into a single zero-padded (16, 128) head weight, packs all
    biases into one (8, 128) f32 tile, and optionally casts weights to bf16.
    Call this once at param-load time; pass the result to actor_forward.
    """
    A = params["w4"].shape[1]
    assert 2 * A <= OUT_W, "action_dim too large for the 128-lane packed head"

    w45 = jnp.concatenate([params["w4"], params["w5"]], axis=1)
    w45 = jnp.pad(w45, ((0, 0), (0, OUT_W - 2 * A)))
    b45 = jnp.concatenate([params["b4"], params["b5"]], axis=1)
    b45 = jnp.pad(b45, ((0, 0), (0, OUT_W - 2 * A)))

    def _pad_row(b):
        return jnp.pad(b, ((0, 0), (0, OUT_W - b.shape[1])))

    b_packed = jnp.concatenate(
        [_pad_row(params["b1"]), _pad_row(params["b2"]),
         _pad_row(params["b3"]), b45,
         jnp.zeros((BIAS_ROWS - 4, OUT_W), jnp.float32)], axis=0)

    cd = compute_dtype
    return {
        "w1": params["w1"].astype(cd),
        "w2": params["w2"].astype(cd),
        "w3": params["w3"].astype(cd),
        "w45": w45.astype(cd),
        "b": b_packed.astype(jnp.float32),   # epilogue stays f32
    }


def _round_up(x, m):
    return (x + m - 1) // m * m


def actor_forward(state, packed, action_dim, action_bound, *,
                  block_b=4096, min_blocks=2):
    """state: (B, state_dim).  packed: output of pack_params().

    Returns (mu * action_bound, std), each (B, action_dim) f32.
    """
    cd = packed["w1"].dtype
    state = jnp.asarray(state).astype(cd)
    B, state_dim = state.shape
    A = int(action_dim)

    # Batch tiling:
    #  * B <= 8: single block equal to the full array (no sub-sublane tiles).
    #  * B  > 8: 8-aligned tile sized so there are >= min_blocks grid steps
    #    (megacore sharding on v7x), capped at block_b to amortize per-step
    #    overhead on v5e/v6e.  The last block may be ragged; Pallas masks the
    #    out-of-range writeback, so no host-side padding is needed.
    if B <= 8:
        TB = B
    else:
        tb = _round_up(pl.cdiv(B, min_blocks), 8)
        TB = max(8, min(block_b, tb))
    nb = pl.cdiv(B, TB)

    const2 = lambda i: (0, 0)

    out = pl.pallas_call(
        functools.partial(_actor_kernel, float(action_bound), A),
        out_shape=jax.ShapeDtypeStruct((B, OUT_W), jnp.float32),
        grid=(nb,),
        in_specs=[
            pl.BlockSpec((TB, state_dim), lambda i: (i, 0)),
            pl.BlockSpec(packed["w1"].shape, const2),
            pl.BlockSpec(packed["w2"].shape, const2),
            pl.BlockSpec(packed["w3"].shape, const2),
            pl.BlockSpec(packed["w45"].shape, const2),
            pl.BlockSpec(packed["b"].shape, const2),
        ],
        out_specs=pl.BlockSpec((TB, OUT_W), lambda i: (i, 0)),
        compiler_params=pltpu.CompilerParams(
            dimension_semantics=("parallel",)),
    )(state, packed["w1"], packed["w2"], packed["w3"],
      packed["w45"], packed["b"])

    return out[:, :A], out[:, A:2 * A]


def init_params(key, state_dim, action_dim):
    """Deterministic init mimicking PyTorch Linear default (U[-1/sqrt(in), 1/sqrt(in)])."""
    dims = [(state_dim, 64), (64, 32), (32, 16),
            (16, action_dim), (16, action_dim)]
    names = ["1", "2", "3", "4", "5"]
    params = {}
    for (fan_in, fan_out), name in zip(dims, names):
        key, kw, kb = jax.random.split(key, 3)
        bound = 1.0 / jnp.sqrt(float(fan_in))
        params[f"w{name}"] = jax.random.uniform(
            kw, (fan_in, fan_out), jnp.float32, -bound, bound)
        params[f"b{name}"] = jax.random.uniform(
            kb, (1, fan_out), jnp.float32, -bound, bound)
    return params


def actor_forward_ref(state, params, action_bound):
    """Pure-JAX reference for correctness check."""
    h = jnp.maximum(state @ params["w1"] + params["b1"], 0.0)
    h = jnp.maximum(h @ params["w2"] + params["b2"], 0.0)
    h = jnp.maximum(h @ params["w3"] + params["b3"], 0.0)
    mu = jnp.tanh(h @ params["w4"] + params["b4"]) * action_bound
    std = jax.nn.softplus(h @ params["w5"] + params["b5"])
    return mu, std


# TODO(synk): log_pdf / get_action / Learn (SharedAdam optimizer step) are
# host-side training/sampling logic and are intentionally not implemented as
# Pallas kernels; only forward() is.

if __name__ == "__main__":
    state_dim = 8
    action_dim = 2
    action_bound = 2.0
    batch = 4

    key = jax.random.PRNGKey(0)
    key, k_state = jax.random.split(key)
    params = init_params(key, state_dim, action_dim)
    packed_f32 = pack_params(params)                       # packed once, off the hot path
    state = jax.random.normal(k_state, (batch, state_dim), jnp.float32)

    # 1) Small-batch (single block) path, f32.
    mu, std = actor_forward(state, packed_f32, action_dim, action_bound)
    jax.block_until_ready((mu, std))
    mu_ref, std_ref = actor_forward_ref(state, params, action_bound)
    assert mu.shape == (batch, action_dim) and std.shape == (batch, action_dim)
    assert jnp.allclose(mu, mu_ref, atol=1e-5), "mu mismatch"
    assert jnp.allclose(std, std_ref, atol=1e-5), "std mismatch"

    # 2) Multi-block path with a ragged last block (20 rows, TB=8 -> 8+8+4).
    key, k_big = jax.random.split(key)
    state_big = jax.random.normal(k_big, (20, state_dim), jnp.float32)
    mu_b, std_b = actor_forward(state_big, packed_f32, action_dim, action_bound,
                                block_b=8)
    jax.block_until_ready((mu_b, std_b))
    mu_br, std_br = actor_forward_ref(state_big, params, action_bound)
    assert jnp.allclose(mu_b, mu_br, atol=1e-5), "mu mismatch (tiled/ragged)"
    assert jnp.allclose(std_b, std_br, atol=1e-5), "std mismatch (tiled/ragged)"

    # 3) bf16 weights/activations with f32 accumulation (looser tolerance).
    packed_bf16 = pack_params(params, compute_dtype=jnp.bfloat16)
    key, k16 = jax.random.split(key)
    state16 = jax.random.normal(k16, (16, state_dim), jnp.float32)
    mu_h, std_h = actor_forward(state16, packed_bf16, action_dim, action_bound)
    jax.block_until_ready((mu_h, std_h))
    mu_hr, std_hr = actor_forward_ref(state16, params, action_bound)
    assert jnp.allclose(mu_h, mu_hr, atol=5e-2), "mu mismatch (bf16)"
    assert jnp.allclose(std_h, std_hr, atol=5e-2), "std mismatch (bf16)"

    print("KERNEL_OK")
</pallas_src>

<mosaic_0001>
module attributes {stable_mosaic.version = 11 : i64} {
  func.func @_actor_kernel(%arg0: i32, %arg1: memref<4x8xf32, #tpu.memory_space<vmem>>, %arg2: memref<8x64xf32, #tpu.memory_space<vmem>>, %arg3: memref<64x32xf32, #tpu.memory_space<vmem>>, %arg4: memref<32x16xf32, #tpu.memory_space<vmem>>, %arg5: memref<16x128xf32, #tpu.memory_space<vmem>>, %arg6: memref<8x128xf32, #tpu.memory_space<vmem>>, %arg7: memref<4x128xf32, #tpu.memory_space<vmem>>) attributes {dimension_semantics = [#tpu.dimension_semantics<parallel>], iteration_bounds = array<i64: 1>, scalar_prefetch = 0 : i64, scratch_operands = 0 : i64, tpu.core_type = #tpu.core_type<tc>, window_params = [{transform_indices = @transform_0, window_bounds = array<i64: 4, 8>}, {pipeline_mode = #tpu.pipeline_mode<synchronous>, transform_indices = @transform_1, window_bounds = array<i64: 8, 64>}, {pipeline_mode = #tpu.pipeline_mode<synchronous>, transform_indices = @transform_2, window_bounds = array<i64: 64, 32>}, {pipeline_mode = #tpu.pipeline_mode<synchronous>, transform_indices = @transform_3, window_bounds = array<i64: 32, 16>}, {pipeline_mode = #tpu.pipeline_mode<synchronous>, transform_indices = @transform_4, window_bounds = array<i64: 16, 128>}, {pipeline_mode = #tpu.pipeline_mode<synchronous>, transform_indices = @transform_5, window_bounds = array<i64: 8, 128>}, {transform_indices = @transform_6, window_bounds = array<i64: 4, 128>}]} {
    %c0 = arith.constant 0 : index
    %c0_0 = arith.constant 0 : index
    %0 = vector.load %arg1[%c0, %c0_0] : memref<4x8xf32, #tpu.memory_space<vmem>>, vector<4x8xf32>
    %c0_1 = arith.constant 0 : index
    %c0_2 = arith.constant 0 : index
    %1 = vector.load %arg2[%c0_1, %c0_2] : memref<8x64xf32, #tpu.memory_space<vmem>>, vector<8x64xf32>
    %cst = arith.constant dense<0.000000e+00> : vector<4x64xf32>
    %2 = tpu.matmul %0, %1, %cst {dimension_numbers = #tpu.dot_dimension_numbers<[1], [0], [0], [1], [0, 0, 1, 1], [], []>} : vector<4x8xf32>, vector<8x64xf32>, vector<4x64xf32> -> vector<4x64xf32>
    %c0_3 = arith.constant 0 : index
    %c0_4 = arith.constant 0 : index
    %3 = vector.load %arg6[%c0_3, %c0_4] : memref<8x128xf32, #tpu.memory_space<vmem>>, vector<1x64xf32>
    %4 = vector.broadcast %3 : vector<1x64xf32> to vector<4x64xf32>
    %5 = arith.addf %2, %4 : vector<4x64xf32>
    %cst_5 = arith.constant 0.000000e+00 : f32
    %6 = vector.broadcast %cst_5 : f32 to vector<4x64xf32>
    %7 = arith.maximumf %5, %6 : vector<4x64xf32>
    %c0_6 = arith.constant 0 : index
    %c0_7 = arith.constant 0 : index
    %8 = vector.load %arg3[%c0_6, %c0_7] : memref<64x32xf32, #tpu.memory_space<vmem>>, vector<64x32xf32>
    %cst_8 = arith.constant dense<0.000000e+00> : vector<4x32xf32>
    %9 = tpu.matmul %7, %8, %cst_8 {dimension_numbers = #tpu.dot_dimension_numbers<[1], [0], [0], [1], [0, 0, 1, 1], [], []>} : vector<4x64xf32>, vector<64x32xf32>, vector<4x32xf32> -> vector<4x32xf32>
    %c1 = arith.constant 1 : index
    %c0_9 = arith.constant 0 : index
    %10 = vector.load %arg6[%c1, %c0_9] : memref<8x128xf32, #tpu.memory_space<vmem>>, vector<1x32xf32>
    %11 = vector.broadcast %10 : vector<1x32xf32> to vector<4x32xf32>
    %12 = arith.addf %9, %11 : vector<4x32xf32>
    %cst_10 = arith.constant 0.000000e+00 : f32
    %13 = vector.broadcast %cst_10 : f32 to vector<4x32xf32>
    %14 = arith.maximumf %12, %13 : vector<4x32xf32>
    %c0_11 = arith.constant 0 : index
    %c0_12 = arith.constant 0 : index
    %15 = vector.load %arg4[%c0_11, %c0_12] : memref<32x16xf32, #tpu.memory_space<vmem>>, vector<32x16xf32>
    %cst_13 = arith.constant dense<0.000000e+00> : vector<4x16xf32>
    %16 = tpu.matmul %14, %15, %cst_13 {dimension_numbers = #tpu.dot_dimension_numbers<[1], [0], [0], [1], [0, 0, 1, 1], [], []>} : vector<4x32xf32>, vector<32x16xf32>, vector<4x16xf32> -> vector<4x16xf32>
    %c2 = arith.constant 2 : index
    %c0_14 = arith.constant 0 : index
    %17 = vector.load %arg6[%c2, %c0_14] : memref<8x128xf32, #tpu.memory_space<vmem>>, vector<1x16xf32>
    %18 = vector.broadcast %17 : vector<1x16xf32> to vector<4x16xf32>
    %19 = arith.addf %16, %18 : vector<4x16xf32>
    %cst_15 = arith.constant 0.000000e+00 : f32
    %20 = vector.broadcast %cst_15 : f32 to vector<4x16xf32>
    %21 = arith.maximumf %19, %20 : vector<4x16xf32>
    %c0_16 = arith.constant 0 : index
    %c0_17 = arith.constant 0 : index
    %22 = vector.load %arg5[%c0_16, %c0_17] : memref<16x128xf32, #tpu.memory_space<vmem>>, vector<16x128xf32>
    %cst_18 = arith.constant dense<0.000000e+00> : vector<4x128xf32>
    %23 = tpu.matmul %21, %22, %cst_18 {dimension_numbers = #tpu.dot_dimension_numbers<[1], [0], [0], [1], [0, 0, 1, 1], [], []>} : vector<4x16xf32>, vector<16x128xf32>, vector<4x128xf32> -> vector<4x128xf32>
    %c3 = arith.constant 3 : index
    %c0_19 = arith.constant 0 : index
    %24 = vector.load %arg6[%c3, %c0_19] : memref<8x128xf32, #tpu.memory_space<vmem>>, vector<1x128xf32>
    %25 = vector.broadcast %24 : vector<1x128xf32> to vector<4x128xf32>
    %26 = arith.addf %23, %25 : vector<4x128xf32>
    %27 = tpu.iota {dimensions = array<i32: 1>} : vector<4x128xi32>
    %28 = math.tanh %26 : vector<4x128xf32>
    %cst_20 = arith.constant 2.000000e+00 : f32
    %29 = vector.broadcast %cst_20 : f32 to vector<4x128xf32>
    %30 = arith.mulf %28, %29 : vector<4x128xf32>
    %cst_21 = arith.constant 2.000000e+01 : f32
    %31 = vector.broadcast %cst_21 : f32 to vector<4x128xf32>
    %32 = arith.cmpf ogt, %26, %31 : vector<4x128xf32>
    %33 = math.exp %26 : vector<4x128xf32>
    %34 = math.log1p %33 : vector<4x128xf32>
    %35 = arith.select %32, %26, %34 : vector<4x128xi1>, vector<4x128xf32>
    %c2_i32 = arith.constant 2 : i32
    %36 = vector.broadcast %c2_i32 : i32 to vector<4x128xi32>
    %37 = arith.cmpi slt, %27, %36 : vector<4x128xi32>
    %38 = arith.select %37, %30, %35 : vector<4x128xi1>, vector<4x128xf32>
    %c0_22 = arith.constant 0 : index
    %c0_23 = arith.constant 0 : index
    %39 = vector.load %arg7[%c0_22, %c0_23] : memref<4x128xf32, #tpu.memory_space<vmem>>, vector<4x128xf32>
    tpu.vector_store %arg7[%c0_22, %c0_23], %38 {strides = array<i32>} : memref<4x128xf32, #tpu.memory_space<vmem>>, vector<4x128xf32>,
    return
  }
  func.func @transform_0(%arg0: i32) -> (i32, i32) {
    %c0_i32 = arith.constant 0 : i32
    %c0_i32_0 = arith.constant 0 : i32
    return %arg0, %c0_i32 : i32, i32
  }
  func.func @transform_1(%arg0: i32) -> (i32, i32) {
    %c0_i32 = arith.constant 0 : i32
    %c0_i32_0 = arith.constant 0 : i32
    %c0_i32_1 = arith.constant 0 : i32
    return %c0_i32, %c0_i32_0 : i32, i32
  }
  func.func @transform_2(%arg0: i32) -> (i32, i32) {
    %c0_i32 = arith.constant 0 : i32
    %c0_i32_0 = arith.constant 0 : i32
    %c0_i32_1 = arith.constant 0 : i32
    return %c0_i32, %c0_i32_0 : i32, i32
  }
  func.func @transform_3(%arg0: i32) -> (i32, i32) {
    %c0_i32 = arith.constant 0 : i32
    %c0_i32_0 = arith.constant 0 : i32
    %c0_i32_1 = arith.constant 0 : i32
    return %c0_i32, %c0_i32_0 : i32, i32
  }
  func.func @transform_4(%arg0: i32) -> (i32, i32) {
    %c0_i32 = arith.constant 0 : i32
    %c0_i32_0 = arith.constant 0 : i32
    %c0_i32_1 = arith.constant 0 : i32
    return %c0_i32, %c0_i32_0 : i32, i32
  }
  func.func @transform_5(%arg0: i32) -> (i32, i32) {
    %c0_i32 = arith.constant 0 : i32
    %c0_i32_0 = arith.constant 0 : i32
    %c0_i32_1 = arith.constant 0 : i32
    return %c0_i32, %c0_i32_0 : i32, i32
  }
  func.func @transform_6(%arg0: i32) -> (i32, i32) {
    %c0_i32 = arith.constant 0 : i32
    %c0_i32_0 = arith.constant 0 : i32
    return %arg0, %c0_i32 : i32, i32
  }
}

</mosaic_0001>

<llo_original>
// kernel: tpu_custom_call.1
$region0: #{tpu_custom_call.1}
  #allocation0 [shape = 'u32[]', space=smem, size = 0x4, offset = 0x4, fixed_abs, tag = 'smem constant byte address 0x4 - core index']
  #allocation1 [shape = 'u32[144,128]{1,0:T(1,128)}', space=vmem, size = 0x12000, scoped, tag = 'internal scratch']
  %s0 = inlined_call_operand.vmem [shape: f32[4,8], index: 0, kind: input, shape index: {}]
  %s1 = inlined_call_operand.vmem [shape: f32[8,64], index: 1, kind: input, shape index: {}]
  %s2 = inlined_call_operand.vmem [shape: f32[64,32], index: 2, kind: input, shape index: {}]
  %s3 = inlined_call_operand.vmem [shape: f32[32,16], index: 3, kind: input, shape index: {}]
  %s4 = inlined_call_operand.vmem [shape: f32[16,128], index: 4, kind: input, shape index: {}]
  %s5 = inlined_call_operand.vmem [shape: f32[8,128], index: 5, kind: input, shape index: {}]
  %s6 = inlined_call_operand.hbm [shape: f32[4,128], index: 6, kind: output, shape index: {}]
  %s7 = sld [smem:[#allocation0]]
  $region34: #{tpu_custom_call.1} parent=0
    _
  %s9 = ssub.s32 1, %s7
  %s10 = scalar_select 0, %s9, %s7
  $region1: #{tpu_custom_call.1} parent=0
    #allocation2 [shape = 'u8[2048]{0}', space=vmem, size = 0x800, scoped, tag = 'output window, operand 0, single buffered']
    #allocation3 [shape = 's32[1]{0}', space=sflag, size = 0x4, scoped, tag = 'scoped memory for tpu_custom_call.1']
    %11 = vsyncpa [#allocation3], 0
    // Predicated region
    $region2: #{tpu_custom_call.1} parent=1 // pred_check
      _
    $region3: #{tpu_custom_call.1} parent=1 // pred_check_branch
      %13 = sbr.rel (0) target = $region5
    $region4: #{tpu_custom_call.1} parent=1 // pred_region
      _
    $region5: #{tpu_custom_call.1} parent=1 // pred_fallthru
      _
    // Predicated region
    $region6: #{tpu_custom_call.1} parent=1 // pred_check
      _
    $region7: #{tpu_custom_call.1} parent=1 // pred_check_branch
      %15 = sbr.rel (0) target = $region9
    $region8: #{tpu_custom_call.1} parent=1 // pred_region
      _
    $region9: #{tpu_custom_call.1} parent=1 // pred_fallthru
      _
    // Predicated region
    $region10: #{tpu_custom_call.1} parent=1 // pred_check
      _
    $region11: #{tpu_custom_call.1} parent=1 // pred_check_branch
      %17 = sbr.rel (0) target = $region13
    $region12: #{tpu_custom_call.1} parent=1 // pred_region
      _
    $region13: #{tpu_custom_call.1} parent=1 // pred_fallthru
      _
    // Predicated region
    $region14: #{tpu_custom_call.1} parent=1 // pred_check
      _
    $region15: #{tpu_custom_call.1} parent=1 // pred_check_branch
      %19 = sbr.rel (0) target = $region17
    $region16: #{tpu_custom_call.1} parent=1 // pred_region
      _
    $region17: #{tpu_custom_call.1} parent=1 // pred_fallthru
      _
    // Predicated region
    $region18: #{tpu_custom_call.1} parent=1 // pred_check
      _
    $region19: #{tpu_custom_call.1} parent=1 // pred_check_branch
      %21 = sbr.rel (0) target = $region21
    $region20: #{tpu_custom_call.1} parent=1 // pred_region
      _
    $region21: #{tpu_custom_call.1} parent=1 // pred_fallthru
      _
    // Predicated region
    $region22: #{tpu_custom_call.1} parent=1 // pred_check
      _
    $region23: #{tpu_custom_call.1} parent=1 // pred_check_branch
      %23 = sbr.rel (0) target = $region25
    $region24: #{tpu_custom_call.1} parent=1 // pred_region
      _
    $region25: #{tpu_custom_call.1} parent=1 // pred_fallthru
      _
    %v24 = vld [vmem:[%s0] sm:$0xf]
    %v25 = vld [vmem:[%s1] sm:$0xff]
    %v26 = vld [vmem:[%s5] sm:$0x1]
    %v27 = vlaneseq
    %v28 = vshrl.u32 %v27, 7
    %v29 = vsub.s32 0, %v28
    %v30 = vrot.slane %v26, %v29
    %vm31 = vcmask 64512
    %v33 = vsel %vm31, %v24, 0
    %35 = vmatprep.subr.mxu0 0.0
    %36 = vmatpush1.msra.mxu0 0.0
    %37 = vmatprep.subr.mxu0 0.0
    %38 = vmatpush1.msra.mxu0 0.0
    %39 = vmatprep.subr.mxu0 0.0
    %40 = vmatpush1.msra.mxu0 0.0
    %41 = vmatprep.subr.mxu0 0.0
    %42 = vmatpush1.msra.mxu0 0.0
    %43 = vmatprep.subr.mxu0 0.0
    %44 = vmatpush1.msra.mxu0 0.0
    %45 = vmatprep.subr.mxu0 0.0
    %46 = vmatpush1.msra.mxu0 0.0
    %47 = vmatprep.subr.mxu0 0.0
    %48 = vmatpush1.msra.mxu0 0.0
    %49 = vmatprep.subr.mxu0 0.0
    %50 = vmatpush1.msra.mxu0 0.0
    %51 = vmatprep.subr.mxu0 0.0
    %52 = vmatpush1.msra.mxu0 0.0
    %53 = vmatprep.subr.mxu0 0.0
    %54 = vmatpush1.msra.mxu0 0.0
    %55 = vmatprep.subr.mxu0 0.0
    %56 = vmatpush1.msra.mxu0 0.0
    %57 = vmatprep.subr.mxu0 0.0
    %58 = vmatpush1.msra.mxu0 0.0
    %59 = vmatprep.subr.mxu0 0.0
    %60 = vmatpush1.msra.mxu0 0.0
    %61 = vmatprep.subr.mxu0 0.0
    %62 = vmatpush1.msra.mxu0 0.0
    %63 = vmatprep.subr.mxu0 0.0
    %64 = vmatpush1.msra.mxu0 0.0
    %65 = vmatprep.subr.mxu0 0.0
    %66 = vmatpush1.msra.mxu0 %v25
    %67 = vmatprep.subr.mxu0 0.0
    %68 = vmatpush2.msra.mxu0 0.0
    %69 = vmatprep.subr.mxu0 0.0
    %70 = vmatpush2.msra.mxu0 0.0
    %71 = vmatprep.subr.mxu0 0.0
    %72 = vmatpush2.msra.mxu0 0.0
    %73 = vmatprep.subr.mxu0 0.0
    %74 = vmatpush2.msra.mxu0 0.0
    %75 = vmatprep.subr.mxu0 0.0
    %76 = vmatpush2.msra.mxu0 0.0
    %77 = vmatprep.subr.mxu0 0.0
    %78 = vmatpush2.msra.mxu0 0.0
    %79 = vmatprep.subr.mxu0 0.0
    %80 = vmatpush2.msra.mxu0 0.0
    %81 = vmatprep.subr.mxu0 0.0
    %82 = vmatpush2.msra.mxu0 0.0
    %83 = vmatprep.subr.mxu0 0.0
    %84 = vmatpush2.msra.mxu0 0.0
    %85 = vmatprep.subr.mxu0 0.0
    %86 = vmatpush2.msra.mxu0 0.0
    %87 = vmatprep.subr.mxu0 0.0
    %88 = vmatpush2.msra.mxu0 0.0
    %89 = vmatprep.subr.mxu0 0.0
    %90 = vmatpush2.msra.mxu0 0.0
    %91 = vmatprep.subr.mxu0 0.0
    %92 = vmatpush2.msra.mxu0 0.0
    %93 = vmatprep.subr.mxu0 0.0
    %94 = vmatpush2.msra.mxu0 0.0
    %95 = vmatprep.subr.mxu0 0.0
    %96 = vmatpush2.msra.mxu0 0.0
    %97 = vmatprep.subr.mxu0 0.0
    %98 = vmatpush2.msra.mxu0 0.0
    %99 = vmatprep.mubr.f32.mxu0 0.0
    %100 = vmatmul.mubr.f32.gmra.mxu0 %v33
    %v101 = vpop.f32.mrf.mxu0
    %v102 = vadd.f32 %v30, %v101
    %v103 = vpop.f32.mrf.mxu0
    %104 = vdwg.mxu0
    %v105 = vmax.f32 %v102, 0.0
    %v106 = vld [vmem:[%s2] sm:$0xff]
    %v107 = vld [vmem:[%s2 + $0x8] sm:$0xff]
    %v108 = vld [vmem:[%s2 + $0x10] sm:$0xff]
    %v109 = vld [vmem:[%s2 + $0x18] sm:$0xff]
    %v110 = vld [vmem:[%s2 + $0x20] sm:$0xff]
    %v111 = vld [vmem:[%s2 + $0x28] sm:$0xff]
    %v112 = vld [vmem:[%s2 + $0x30] sm:$0xff]
    %v113 = vld [vmem:[%s2 + $0x38] sm:$0xff]
    %v114 = vld [vmem:[%s5 + $0x1] sm:$0x1]
    %v115 = vlaneseq
    %v116 = vshrl.u32 %v115, 7
    %v117 = vsub.s32 0, %v116
    %v118 = vrot.slane %v114, %v117
    %vm119 = vcmask 523264
    %v121 = vsel %vm119, %v105, 0
    %123 = vmatprep.subr.mxu0 0.0
    %124 = vmatpush1.msra.mxu0 0.0
    %125 = vmatprep.subr.mxu0 0.0
    %126 = vmatpush1.msra.mxu0 0.0
    %127 = vmatprep.subr.mxu0 0.0
    %128 = vmatpush1.msra.mxu0 0.0
    %129 = vmatprep.subr.mxu0 0.0
    %130 = vmatpush1.msra.mxu0 0.0
    %131 = vmatprep.subr.mxu0 0.0
    %132 = vmatpush1.msra.mxu0 0.0
    %133 = vmatprep.subr.mxu0 0.0
    %134 = vmatpush1.msra.mxu0 0.0
    %135 = vmatprep.subr.mxu0 0.0
    %136 = vmatpush1.msra.mxu0 0.0
    %137 = vmatprep.subr.mxu0 0.0
    %138 = vmatpush1.msra.mxu0 0.0
    %139 = vmatprep.subr.mxu0 0.0
    %140 = vmatpush1.msra.mxu0 %v113
    %141 = vmatprep.subr.mxu0 0.0
    %142 = vmatpush1.msra.mxu0 %v112
    %143 = vmatprep.subr.mxu0 0.0
    %144 = vmatpush1.msra.mxu0 %v111
    %145 = vmatprep.subr.mxu0 0.0
    %146 = vmatpush1.msra.mxu0 %v110
    %147 = vmatprep.subr.mxu0 0.0
    %148 = vmatpush1.msra.mxu0 %v109
    %149 = vmatprep.subr.mxu0 0.0
    %150 = vmatpush1.msra.mxu0 %v108
    %151 = vmatprep.subr.mxu0 0.0
    %152 = vmatpush1.msra.mxu0 %v107
    %153 = vmatprep.subr.mxu0 0.0
    %154 = vmatpush1.msra.mxu0 %v106
    %155 = vmatprep.subr.mxu0 0.0
    %156 = vmatpush2.msra.mxu0 0.0
    %157 = vmatprep.subr.mxu0 0.0
    %158 = vmatpush2.msra.mxu0 0.0
    %159 = vmatprep.subr.mxu0 0.0
    %160 = vmatpush2.msra.mxu0 0.0
    %161 = vmatprep.subr.mxu0 0.0
    %162 = vmatpush2.msra.mxu0 0.0
    %163 = vmatprep.subr.mxu0 0.0
    %164 = vmatpush2.msra.mxu0 0.0
    %165 = vmatprep.subr.mxu0 0.0
    %166 = vmatpush2.msra.mxu0 0.0
    %167 = vmatprep.subr.mxu0 0.0
    %168 = vmatpush2.msra.mxu0 0.0
    %169 = vmatprep.subr.mxu0 0.0
    %170 = vmatpush2.msra.mxu0 0.0
    %171 = vmatprep.subr.mxu0 0.0
    %172 = vmatpush2.msra.mxu0 0.0
    %173 = vmatprep.subr.mxu0 0.0
    %174 = vmatpush2.msra.mxu0 0.0
    %175 = vmatprep.subr.mxu0 0.0
    %176 = vmatpush2.msra.mxu0 0.0
    %177 = vmatprep.subr.mxu0 0.0
    %178 = vmatpush2.msra.mxu0 0.0
    %179 = vmatprep.subr.mxu0 0.0
    %180 = vmatpush2.msra.mxu0 0.0
    %181 = vmatprep.subr.mxu0 0.0
    %182 = vmatpush2.msra.mxu0 0.0
    %183 = vmatprep.subr.mxu0 0.0
    %184 = vmatpush2.msra.mxu0 0.0
    %185 = vmatprep.subr.mxu0 0.0
    %186 = vmatpush2.msra.mxu0 0.0
    %187 = vmatprep.mubr.f32.mxu0 0.0
    %188 = vmatmul.mubr.f32.gmra.mxu0 %v121
    %v189 = vpop.f32.mrf.mxu0
    %v190 = vadd.f32 %v118, %v189
    %v191 = vpop.f32.mrf.mxu0
    %192 = vdwg.mxu0
    %v193 = vmax.f32 %v190, 0.0
    %v194 = vld [vmem:[%s3] sm:$0xff]
    %v195 = vld [vmem:[%s3 + $0x8] sm:$0xff]
    %v196 = vld [vmem:[%s3 + $0x10] sm:$0xff]
    %v197 = vld [vmem:[%s3 + $0x18] sm:$0xff]
    %v198 = vld [vmem:[%s5 + $0x2] sm:$0x1]
    %v199 = vlaneseq
    %v200 = vshrl.u32 %v199, 7
    %v201 = vsub.s32 0, %v200
    %v202 = vrot.slane %v198, %v201
    %vm203 = vcmask 261120
    %v205 = vsel %vm203, %v193, 0
    %207 = vmatprep.subr.mxu0 0.0
    %208 = vmatpush1.msra.mxu0 0.0
    %209 = vmatprep.subr.mxu0 0.0
    %210 = vmatpush1.msra.mxu0 0.0
    %211 = vmatprep.subr.mxu0 0.0
    %212 = vmatpush1.msra.mxu0 0.0
    %213 = vmatprep.subr.mxu0 0.0
    %214 = vmatpush1.msra.mxu0 0.0
    %215 = vmatprep.subr.mxu0 0.0
    %216 = vmatpush1.msra.mxu0 0.0
    %217 = vmatprep.subr.mxu0 0.0
    %218 = vmatpush1.msra.mxu0 0.0
    %219 = vmatprep.subr.mxu0 0.0
    %220 = vmatpush1.msra.mxu0 0.0
    %221 = vmatprep.subr.mxu0 0.0
    %222 = vmatpush1.msra.mxu0 0.0
    %223 = vmatprep.subr.mxu0 0.0
    %224 = vmatpush1.msra.mxu0 0.0
    %225 = vmatprep.subr.mxu0 0.0
    %226 = vmatpush1.msra.mxu0 0.0
    %227 = vmatprep.subr.mxu0 0.0
    %228 = vmatpush1.msra.mxu0 0.0
    %229 = vmatprep.subr.mxu0 0.0
    %230 = vmatpush1.msra.mxu0 0.0
    %231 = vmatprep.subr.mxu0 0.0
    %232 = vmatpush1.msra.mxu0 %v197
    %233 = vmatprep.subr.mxu0 0.0
    %234 = vmatpush1.msra.mxu0 %v196
    %235 = vmatprep.subr.mxu0 0.0
    %236 = vmatpush1.msra.mxu0 %v195
    %237 = vmatprep.subr.mxu0 0.0
    %238 = vmatpush1.msra.mxu0 %v194
    %239 = vmatprep.subr.mxu0 0.0
    %240 = vmatpush2.msra.mxu0 0.0
    %241 = vmatprep.subr.mxu0 0.0
    %242 = vmatpush2.msra.mxu0 0.0
    %243 = vmatprep.subr.mxu0 0.0
    %244 = vmatpush2.msra.mxu0 0.0
    %245 = vmatprep.subr.mxu0 0.0
    %246 = vmatpush2.msra.mxu0 0.0
    %247 = vmatprep.subr.mxu0 0.0
    %248 = vmatpush2.msra.mxu0 0.0
    %249 = vmatprep.subr.mxu0 0.0
    %250 = vmatpush2.msra.mxu0 0.0
    %251 = vmatprep.subr.mxu0 0.0
    %252 = vmatpush2.msra.mxu0 0.0
    %253 = vmatprep.subr.mxu0 0.0
    %254 = vmatpush2.msra.mxu0 0.0
    %255 = vmatprep.subr.mxu0 0.0
    %256 = vmatpush2.msra.mxu0 0.0
    %257 = vmatprep.subr.mxu0 0.0
    %258 = vmatpush2.msra.mxu0 0.0
    %259 = vmatprep.subr.mxu0 0.0
    %260 = vmatpush2.msra.mxu0 0.0
    %261 = vmatprep.subr.mxu0 0.0
    %262 = vmatpush2.msra.mxu0 0.0
    %263 = vmatprep.subr.mxu0 0.0
    %264 = vmatpush2.msra.mxu0 0.0
    %265 = vmatprep.subr.mxu0 0.0
    %266 = vmatpush2.msra.mxu0 0.0
    %267 = vmatprep.subr.mxu0 0.0
    %268 = vmatpush2.msra.mxu0 0.0
    %269 = vmatprep.subr.mxu0 0.0
    %270 = vmatpush2.msra.mxu0 0.0
    %271 = vmatprep.mubr.f32.mxu0 0.0
    %272 = vmatmul.mubr.f32.gmra.mxu0 %v205
    %v273 = vpop.f32.mrf.mxu0
    %v274 = vadd.f32 %v202, %v273
    %v275 = vpop.f32.mrf.mxu0
    %276 = vdwg.mxu0
    %v277 = vmax.f32 %v274, 0.0
    %v278 = vld [vmem:[%s4] sm:$0xff]
    %v279 = vld [vmem:[%s4 + $0x8] sm:$0xff]
    %v280 = vld [vmem:[%s5 + $0x3] sm:$0x1]
    %v281 = vlaneseq
    %v282 = vshrl.u32 %v281, 7
    %v283 = vsub.s32 0, %v282
    %v284 = vrot.slane %v280, %v283
    %vm285 = vcmask 130048
    %v287 = vsel %vm285, %v277, 0
    %289 = vmatprep.subr.mxu0 0.0
    %290 = vmatpush1.msra.mxu0 0.0
    %291 = vmatprep.subr.mxu0 0.0
    %292 = vmatpush1.msra.mxu0 0.0
    %293 = vmatprep.subr.mxu0 0.0
    %294 = vmatpush1.msra.mxu0 0.0
    %295 = vmatprep.subr.mxu0 0.0
    %296 = vmatpush1.msra.mxu0 0.0
    %297 = vmatprep.subr.mxu0 0.0
    %298 = vmatpush1.msra.mxu0 0.0
    %299 = vmatprep.subr.mxu0 0.0
    %300 = vmatpush1.msra.mxu0 0.0
    %301 = vmatprep.subr.mxu0 0.0
    %302 = vmatpush1.msra.mxu0 0.0
    %303 = vmatprep.subr.mxu0 0.0
    %304 = vmatpush1.msra.mxu0 0.0
    %305 = vmatprep.subr.mxu0 0.0
    %306 = vmatpush1.msra.mxu0 0.0
    %307 = vmatprep.subr.mxu0 0.0
    %308 = vmatpush1.msra.mxu0 0.0
    %309 = vmatprep.subr.mxu0 0.0
    %310 = vmatpush1.msra.mxu0 0.0
    %311 = vmatprep.subr.mxu0 0.0
    %312 = vmatpush1.msra.mxu0 0.0
    %313 = vmatprep.subr.mxu0 0.0
    %314 = vmatpush1.msra.mxu0 0.0
    %315 = vmatprep.subr.mxu0 0.0
    %316 = vmatpush1.msra.mxu0 0.0
    %317 = vmatprep.subr.mxu0 0.0
    %318 = vmatpush1.msra.mxu0 %v279
    %319 = vmatprep.subr.mxu0 0.0
    %320 = vmatpush1.msra.mxu0 %v278
    %321 = vmatprep.subr.mxu0 0.0
    %322 = vmatpush2.msra.mxu0 0.0
    %323 = vmatprep.subr.mxu0 0.0
    %324 = vmatpush2.msra.mxu0 0.0
    %325 = vmatprep.subr.mxu0 0.0
    %326 = vmatpush2.msra.mxu0 0.0
    %327 = vmatprep.subr.mxu0 0.0
    %328 = vmatpush2.msra.mxu0 0.0
    %329 = vmatprep.subr.mxu0 0.0
    %330 = vmatpush2.msra.mxu0 0.0
    %331 = vmatprep.subr.mxu0 0.0
    %332 = vmatpush2.msra.mxu0 0.0
    %333 = vmatprep.subr.mxu0 0.0
    %334 = vmatpush2.msra.mxu0 0.0
    %335 = vmatprep.subr.mxu0 0.0
    %336 = vmatpush2.msra.mxu0 0.0
    %337 = vmatprep.subr.mxu0 0.0
    %338 = vmatpush2.msra.mxu0 0.0
    %339 = vmatprep.subr.mxu0 0.0
    %340 = vmatpush2.msra.mxu0 0.0
    %341 = vmatprep.subr.mxu0 0.0
    %342 = vmatpush2.msra.mxu0 0.0
    %343 = vmatprep.subr.mxu0 0.0
    %344 = vmatpush2.msra.mxu0 0.0
    %345 = vmatprep.subr.mxu0 0.0
    %346 = vmatpush2.msra.mxu0 0.0
    %347 = vmatprep.subr.mxu0 0.0
    %348 = vmatpush2.msra.mxu0 0.0
    %349 = vmatprep.subr.mxu0 0.0
    %350 = vmatpush2.msra.mxu0 0.0
    %351 = vmatprep.subr.mxu0 0.0
    %352 = vmatpush2.msra.mxu0 0.0
    %353 = vmatprep.mubr.f32.mxu0 0.0
    %354 = vmatmul.mubr.f32.gmra.mxu0 %v287
    %v355 = vpop.f32.mrf.mxu0
    %v356 = vadd.f32 %v284, %v355
    %v357 = vpop.f32.mrf.mxu0
    %358 = vdwg.mxu0
    %v359 = vlaneseq
    %v360 = vand.u32 %v359, 127
    %v361 = vtanh.pop %v356
    %v362 = vmul.f32 %v361, 2.0
    %vm363 = vcmp.gt.f32.partialorder %v356, 20.0
    %v364 = vmul.f32 %v356, 1.442695
    %v365 = vpow.pop %v364
    %v366 = vadd.f32 %v365, 1.0
    %v367 = vlog2.pop %v366
    %v368 = vmul.f32 %v367, 0.6931472
    %v369 = vmul.f32 -0.5, %v365
    %v370 = vadd.f32 %v369, 1.0
    %v371 = vmul.f32 %v370, %v365
    %v372 = vand.u32 2147483647, %v365
    %vm373 = vcmp.lt.f32.partialorder %v372, 0.0004427343
    %v374 = vsel %vm373, %v371, %v368
    %v375 = vsel %vm363, %v356, %v374
    %vm376 = vcmp.lt.s32.totalorder %v360, 2
    %v377 = vsel %vm376, %v362, %v375
    %378 = vst [vmem:[#allocation2] sm:$0xf] %v377
    // Predicated region
    $region26: #{tpu_custom_call.1} parent=1 // pred_check
      _
    $region27: #{tpu_custom_call.1} parent=1 // pred_check_branch
      %380 = sbr.rel (0) target = $region29
    $region28: #{tpu_custom_call.1} parent=1 // pred_region
      %s382 = ssub.s32 64, 64
      %383 = vsyncadd [#allocation3], %s382
      %s385 = sshll.u32 [#allocation2], 4
      %s386 = int_to_ptr.vmem [resolvable:$true] %s385
      %388 = dma.vmem_to_hbm [thread:$0]  %s386, 64, %s6, [#allocation3]
    $region29: #{tpu_custom_call.1} parent=1 // pred_fallthru
      _
    // Predicated region
    $region30: #{tpu_custom_call.1} parent=1 // pred_check
      _
    $region31: #{tpu_custom_call.1} parent=1 // pred_check_branch
      %390 = sbr.rel (0) target = $region33
    $region32: #{tpu_custom_call.1} parent=1 // pred_region
      %391 = dma.done [#allocation3], 64
    $region33: #{tpu_custom_call.1} parent=1 // pred_fallthru
      _
    %392 = vsyncpa [#allocation3], 1

</llo_original>
